<compile_context>
chip_gen: v7x
topology: tpu7x:2x2x1
jax: 0.10.0
libtpu: 0.0.40
codegen_flags: <defaults>
</compile_context>

<pallas_src>
import jax
import jax.numpy as jnp
from jax.experimental import pallas as pl
from jax.experimental.pallas import tpu as pltpu

YEAR_VOCAB = 3000
MONTH_VOCAB = 13
DAY_VOCAB = 32

K_LO = 384                 # year "low" split (rows of the fused weight used by years)
K_HI = 8                   # year "high" groups; K_LO * K_HI = 3072 >= 3000
MD_BASE = K_LO             # month/day rows start here on the one-hot axis
MD_ROWS = MONTH_VOCAB + DAY_VOCAB                      # 45
K_IN = 512                 # padded one-hot width (multiple of 128)

assert K_LO * K_HI >= YEAR_VOCAB
assert K_IN >= MD_BASE + MD_ROWS


def _t2v_kernel(idx_ref, w_ref, out_ref):
    # idx_ref: (TN, 4) int32 = [year_lo, month_pos, day_pos, year_hi]
    # w_ref:   (K_IN, K_HI * F) float32 fused weight (year re-laid-out +
    #          month/day rows replicated into every hi group)
    # out_ref: (TN, F) float32
    idx = idx_ref[...]
    tn = idx.shape[0]
    f = out_ref.shape[1]
    k_in = w_ref.shape[0]
    k_hi = w_ref.shape[1] // f

    lo_y = idx[:, 0:1]          # (TN, 1) year low index, in [0, K_LO)
    m_pos = idx[:, 1:2]         # (TN, 1) month row, in [MD_BASE, MD_BASE+13)
    d_pos = idx[:, 2:3]         # (TN, 1) day row,   in [MD_BASE+13, MD_BASE+45)
    hi_y = idx[:, 3:4]          # (TN, 1) year high group, in [0, K_HI)

    # 3-hot over the fused 512-wide axis (the three hit positions are disjoint
    # by construction, so a plain OR is exact).
    lane = jax.lax.broadcasted_iota(jnp.int32, (tn, k_in), 1)
    hit = (lane == lo_y) | (lane == m_pos) | (lane == d_pos)
    onehot = hit.astype(jnp.float32)                               # (TN, K_IN)

    # Stage 1: one lane-dense matmul produces, for every hi group g,
    #   P[t, g*F + f] = year_pad[g*K_LO + lo_y, f] + month_emb[f] + day_emb[f]
    p = jnp.dot(onehot, w_ref[...], preferred_element_type=jnp.float32)

    # Stage 2: keep only the token's own hi group, then sum the K_HI groups
    # (exactly one group is non-zero per token).  Range test avoids any vector
    # integer division.
    out_lane = jax.lax.broadcasted_iota(jnp.int32, (tn, k_hi * f), 1)
    lo_bound = hi_y * f
    sel = jnp.where((out_lane >= lo_bound) & (out_lane < lo_bound + f), p, 0.0)

    acc = sel[:, 0:f]
    for g in range(1, k_hi):
        acc = acc + sel[:, g * f:(g + 1) * f]

    out_ref[...] = acc.astype(out_ref.dtype)


def _round_up(x, m):
    return ((x + m - 1) // m) * m


def _build_fused_weight(year_tbl, month_tbl, day_tbl):
    """(K_IN, K_HI*F) fused weight.  In a real model build once at init."""
    f = year_tbl.shape[1]
    year_pad = jnp.pad(year_tbl, ((0, K_LO * K_HI - YEAR_VOCAB), (0, 0)))   # (3072, F)
    # w_year[lo, g*F + f] = year_pad[g*K_LO + lo, f]
    w_year = (year_pad.reshape(K_HI, K_LO, f)
              .transpose(1, 0, 2)
              .reshape(K_LO, K_HI * f))
    md = jnp.concatenate([month_tbl, day_tbl], axis=0)                      # (45, F)
    # Replicate month/day rows into every hi group so the group selection in
    # stage 2 keeps exactly one copy of their contribution.
    w_md = jnp.tile(md[:, None, :], (1, K_HI, 1)).reshape(MD_ROWS, K_HI * f)
    pad = jnp.zeros((K_IN - MD_BASE - MD_ROWS, K_HI * f), year_tbl.dtype)
    return jnp.concatenate([w_year, w_md, pad], axis=0)                      # (512, K_HI*F)


def naive_t2v(inputs, year_tbl, month_tbl, day_tbl, *, token_tile=1024):
    """inputs: (B, S, 3) int; tables: (vocab, F) float32 -> (B, S, F) float32."""
    b, s, _ = inputs.shape
    n = b * s
    f = year_tbl.shape[1]

    w = _build_fused_weight(year_tbl, month_tbl, day_tbl)

    # Pre-split indices on the host side (plain XLA): year -> (hi, lo), and
    # month/day offset into the fused one-hot axis.
    inp = inputs.reshape(n, 3).astype(jnp.int32)
    y, m, d = inp[:, 0], inp[:, 1], inp[:, 2]
    hi = y // K_LO
    lo = y - hi * K_LO
    idx = jnp.stack([lo, MD_BASE + m, MD_BASE + MONTH_VOCAB + d, hi], axis=-1)

    # Token tile: big enough to amortize the per-grid-step overhead, small
    # enough that the (TN, 512) one-hot + (TN, 256) partials + double-buffered
    # I/O stay well inside scoped VMEM on every generation.  Tiny N -> 1 step.
    tn = min(token_tile, _round_up(n, 8))
    grid = (pl.cdiv(n, tn),)

    out = pl.pallas_call(
        _t2v_kernel,
        out_shape=jax.ShapeDtypeStruct((n, f), jnp.float32),
        grid=grid,
        in_specs=[
            pl.BlockSpec((tn, 4), lambda i: (i, 0)),             # index tile
            pl.BlockSpec((K_IN, K_HI * f), lambda i: (0, 0)),    # pinned weight
        ],
        out_specs=pl.BlockSpec((tn, f), lambda i: (i, 0)),
        compiler_params=pltpu.CompilerParams(
            dimension_semantics=("parallel",),
            vmem_limit_bytes=32 * 1024 * 1024,
        ),
    )(idx, w)

    return out.reshape(b, s, f)


if __name__ == "__main__":
    n_frequencies = 32
    key = jax.random.PRNGKey(0)
    k_y, k_m, k_d, k_in = jax.random.split(key, 4)

    # nn.Embedding default init: N(0, 1)
    year_tbl = jax.random.normal(k_y, (YEAR_VOCAB, n_frequencies), jnp.float32)
    month_tbl = jax.random.normal(k_m, (MONTH_VOCAB, n_frequencies), jnp.float32)
    day_tbl = jax.random.normal(k_d, (DAY_VOCAB, n_frequencies), jnp.float32)

    def make_inputs(key, b, s):
        k_yr, k_mo, k_da = jax.random.split(key, 3)
        years = jax.random.randint(k_yr, (b, s), 1900, 2100)
        months = jax.random.randint(k_mo, (b, s), 1, 13)
        days = jax.random.randint(k_da, (b, s), 1, 32)
        return jnp.stack([years, months, days], axis=-1).astype(jnp.int32)

    def reference(inp):
        return (year_tbl[inp[..., 0]]
                + month_tbl[inp[..., 1]]
                + day_tbl[inp[..., 2]])

    # Small case (single grid step), matching the module's typical usage.
    B, S = 2, 8
    inputs = make_inputs(k_in, B, S)
    out = jax.block_until_ready(naive_t2v(inputs, year_tbl, month_tbl, day_tbl))
    assert out.shape == (B, S, n_frequencies)
    assert jnp.allclose(out, reference(inputs), atol=1e-5), "small-case mismatch"

    # Larger case exercising the token-parallel grid + ragged tail (N = 1200).
    B2, S2 = 4, 300
    inputs2 = make_inputs(jax.random.PRNGKey(1), B2, S2)
    out2 = jax.block_until_ready(naive_t2v(inputs2, year_tbl, month_tbl, day_tbl))
    assert out2.shape == (B2, S2, n_frequencies)
    assert jnp.allclose(out2, reference(inputs2), atol=1e-5), "tiled-case mismatch"

    print("KERNEL_OK")
</pallas_src>

<mosaic_0001>
module attributes {stable_mosaic.version = 11 : i64} {
  func.func @_t2v_kernel(%arg0: i32, %arg1: memref<16x4xi32, #tpu.memory_space<vmem>>, %arg2: memref<512x256xf32, #tpu.memory_space<vmem>>, %arg3: memref<16x32xf32, #tpu.memory_space<vmem>>) attributes {dimension_semantics = [#tpu.dimension_semantics<parallel>], iteration_bounds = array<i64: 1>, scalar_prefetch = 0 : i64, scratch_operands = 0 : i64, tpu.core_type = #tpu.core_type<tc>, window_params = [{transform_indices = @transform_0, window_bounds = array<i64: 16, 4>}, {pipeline_mode = #tpu.pipeline_mode<synchronous>, transform_indices = @transform_1, window_bounds = array<i64: 512, 256>}, {transform_indices = @transform_2, window_bounds = array<i64: 16, 32>}]} {
    %c0 = arith.constant 0 : index
    %c0_0 = arith.constant 0 : index
    %0 = vector.load %arg1[%c0, %c0_0] : memref<16x4xi32, #tpu.memory_space<vmem>>, vector<16x4xi32>
    %1 = vector.extract_strided_slice %0 {offsets = [0, 0], sizes = [16, 1], strides = [1, 1]} : vector<16x4xi32> to vector<16x1xi32>
    %2 = vector.extract_strided_slice %0 {offsets = [0, 1], sizes = [16, 1], strides = [1, 1]} : vector<16x4xi32> to vector<16x1xi32>
    %3 = vector.extract_strided_slice %0 {offsets = [0, 2], sizes = [16, 1], strides = [1, 1]} : vector<16x4xi32> to vector<16x1xi32>
    %4 = vector.extract_strided_slice %0 {offsets = [0, 3], sizes = [16, 1], strides = [1, 1]} : vector<16x4xi32> to vector<16x1xi32>
    %5 = tpu.iota {dimensions = array<i32: 1>} : vector<16x512xi32>
    %6 = vector.broadcast %1 : vector<16x1xi32> to vector<16x512xi32>
    %7 = arith.cmpi eq, %5, %6 : vector<16x512xi32>
    %8 = vector.broadcast %2 : vector<16x1xi32> to vector<16x512xi32>
    %9 = arith.cmpi eq, %5, %8 : vector<16x512xi32>
    %10 = arith.ori %7, %9 : vector<16x512xi1>
    %11 = vector.broadcast %3 : vector<16x1xi32> to vector<16x512xi32>
    %12 = arith.cmpi eq, %5, %11 : vector<16x512xi32>
    %13 = arith.ori %10, %12 : vector<16x512xi1>
    %14 = arith.extui %13 : vector<16x512xi1> to vector<16x512xi32>
    %15 = arith.sitofp %14 : vector<16x512xi32> to vector<16x512xf32>
    %c0_1 = arith.constant 0 : index
    %c0_2 = arith.constant 0 : index
    %16 = vector.load %arg2[%c0_1, %c0_2] : memref<512x256xf32, #tpu.memory_space<vmem>>, vector<512x256xf32>
    %cst = arith.constant dense<0.000000e+00> : vector<16x256xf32>
    %17 = tpu.matmul %15, %16, %cst {dimension_numbers = #tpu.dot_dimension_numbers<[1], [0], [0], [1], [0, 0, 1, 1], [], []>} : vector<16x512xf32>, vector<512x256xf32>, vector<16x256xf32> -> vector<16x256xf32>
    %18 = tpu.iota {dimensions = array<i32: 1>} : vector<16x256xi32>
    %c32_i32 = arith.constant 32 : i32
    %19 = vector.broadcast %c32_i32 : i32 to vector<16x1xi32>
    %20 = arith.muli %4, %19 : vector<16x1xi32>
    %21 = vector.broadcast %20 : vector<16x1xi32> to vector<16x256xi32>
    %22 = arith.cmpi sge, %18, %21 : vector<16x256xi32>
    %c32_i32_3 = arith.constant 32 : i32
    %23 = vector.broadcast %c32_i32_3 : i32 to vector<16x1xi32>
    %24 = arith.addi %20, %23 : vector<16x1xi32>
    %25 = vector.broadcast %24 : vector<16x1xi32> to vector<16x256xi32>
    %26 = arith.cmpi slt, %18, %25 : vector<16x256xi32>
    %27 = arith.andi %22, %26 : vector<16x256xi1>
    %cst_4 = arith.constant 0.000000e+00 : f32
    %28 = vector.broadcast %cst_4 : f32 to vector<16x256xf32>
    %29 = arith.select %27, %17, %28 : vector<16x256xi1>, vector<16x256xf32>
    %30 = vector.extract_strided_slice %29 {offsets = [0, 0], sizes = [16, 32], strides = [1, 1]} : vector<16x256xf32> to vector<16x32xf32>
    %31 = vector.extract_strided_slice %29 {offsets = [0, 32], sizes = [16, 32], strides = [1, 1]} : vector<16x256xf32> to vector<16x32xf32>
    %32 = arith.addf %30, %31 : vector<16x32xf32>
    %33 = vector.extract_strided_slice %29 {offsets = [0, 64], sizes = [16, 32], strides = [1, 1]} : vector<16x256xf32> to vector<16x32xf32>
    %34 = arith.addf %32, %33 : vector<16x32xf32>
    %35 = vector.extract_strided_slice %29 {offsets = [0, 96], sizes = [16, 32], strides = [1, 1]} : vector<16x256xf32> to vector<16x32xf32>
    %36 = arith.addf %34, %35 : vector<16x32xf32>
    %37 = vector.extract_strided_slice %29 {offsets = [0, 128], sizes = [16, 32], strides = [1, 1]} : vector<16x256xf32> to vector<16x32xf32>
    %38 = arith.addf %36, %37 : vector<16x32xf32>
    %39 = vector.extract_strided_slice %29 {offsets = [0, 160], sizes = [16, 32], strides = [1, 1]} : vector<16x256xf32> to vector<16x32xf32>
    %40 = arith.addf %38, %39 : vector<16x32xf32>
    %41 = vector.extract_strided_slice %29 {offsets = [0, 192], sizes = [16, 32], strides = [1, 1]} : vector<16x256xf32> to vector<16x32xf32>
    %42 = arith.addf %40, %41 : vector<16x32xf32>
    %43 = vector.extract_strided_slice %29 {offsets = [0, 224], sizes = [16, 32], strides = [1, 1]} : vector<16x256xf32> to vector<16x32xf32>
    %44 = arith.addf %42, %43 : vector<16x32xf32>
    %c0_5 = arith.constant 0 : index
    %c0_6 = arith.constant 0 : index
    %45 = vector.load %arg3[%c0_5, %c0_6] : memref<16x32xf32, #tpu.memory_space<vmem>>, vector<16x32xf32>
    tpu.vector_store %arg3[%c0_5, %c0_6], %44 {strides = array<i32>} : memref<16x32xf32, #tpu.memory_space<vmem>>, vector<16x32xf32>,
    return
  }
  func.func @transform_0(%arg0: i32) -> (i32, i32) {
    %c0_i32 = arith.constant 0 : i32
    %c0_i32_0 = arith.constant 0 : i32
    return %arg0, %c0_i32 : i32, i32
  }
  func.func @transform_1(%arg0: i32) -> (i32, i32) {
    %c0_i32 = arith.constant 0 : i32
    %c0_i32_0 = arith.constant 0 : i32
    %c0_i32_1 = arith.constant 0 : i32
    return %c0_i32, %c0_i32_0 : i32, i32
  }
  func.func @transform_2(%arg0: i32) -> (i32, i32) {
    %c0_i32 = arith.constant 0 : i32
    %c0_i32_0 = arith.constant 0 : i32
    return %arg0, %c0_i32 : i32, i32
  }
}

</mosaic_0001>

<llo_original>
// kernel: tpu_custom_call.1
$region0: #{tpu_custom_call.1}
  #allocation0 [shape = 'u32[]', space=smem, size = 0x4, offset = 0x4, fixed_abs, tag = 'smem constant byte address 0x4 - core index']
  #allocation1 [shape = 'u32[144,128]{1,0:T(1,128)}', space=vmem, size = 0x12000, scoped, tag = 'internal scratch']
  %s0 = inlined_call_operand.vmem [shape: s32[16,4], index: 0, kind: input, shape index: {}]
  %s1 = inlined_call_operand.hbm [shape: f32[512,256], index: 1, kind: input, shape index: {}]
  %s2 = inlined_call_operand.hbm [shape: f32[16,32], index: 2, kind: output, shape index: {}]
  %s3 = sld [smem:[#allocation0]]
  $region22: #{tpu_custom_call.1} parent=0
    _
  %s5 = ssub.s32 1, %s3
  %s6 = scalar_select 0, %s5, %s3
  $region1: #{tpu_custom_call.1} parent=0
    #allocation2 [shape = 'u8[524288]{0}', space=vmem, size = 0x80000, scoped, tag = 'input window, operand 1, single buffered']
    #allocation3 [shape = 's32[1]{0}', space=sflag, size = 0x4, scoped, tag = 'scoped memory for tpu_custom_call.1']
    #allocation4 [shape = 's32[1]{0}', space=sflag, size = 0x4, scoped, tag = 'scoped memory for tpu_custom_call.1']
    #allocation5 [shape = 'u8[8192]{0}', space=vmem, size = 0x2000, scoped, tag = 'output window, operand 0, single buffered']
    %7 = vsyncpa [#allocation3], 0
    %8 = vsyncpa [#allocation4], 0
    // Predicated region
    $region2: #{tpu_custom_call.1} parent=1 // pred_check
      _
    $region3: #{tpu_custom_call.1} parent=1 // pred_check_branch
      %10 = sbr.rel (0) target = $region5
    $region4: #{tpu_custom_call.1} parent=1 // pred_region
      _
    $region5: #{tpu_custom_call.1} parent=1 // pred_fallthru
      _
    // Predicated region
    $region6: #{tpu_custom_call.1} parent=1 // pred_check
      _
    $region7: #{tpu_custom_call.1} parent=1 // pred_check_branch
      %12 = sbr.rel (0) target = $region9
    $region8: #{tpu_custom_call.1} parent=1 // pred_region
      %s14 = ssub.s32 16384, 16384
      %15 = vsyncadd [#allocation3], %s14
      %s16 = sshll.u32 [#allocation2], 4
      %s17 = int_to_ptr.vmem [resolvable:$true] %s16
      %22 = dma.hbm_to_vmem [thread:$0]  %s1, 16384, %s17, [#allocation3], 256, 256, 16
    $region9: #{tpu_custom_call.1} parent=1 // pred_fallthru
      _
    // Predicated region
    $region10: #{tpu_custom_call.1} parent=1 // pred_check
      _
    $region11: #{tpu_custom_call.1} parent=1 // pred_check_branch
      %24 = sbr.rel (0) target = $region13
    $region12: #{tpu_custom_call.1} parent=1 // pred_region
      %25 = dma.done [#allocation3], 16384
    $region13: #{tpu_custom_call.1} parent=1 // pred_fallthru
      _
    %v26 = vld [vmem:[%s0] sm:$0xff]
    %v27 = vld [vmem:[%s0 + $0x8] sm:$0xff]
    %v28 = vlaneseq
    %v29 = vand.u32 %v28, 127
    %v30 = vadd.s32 %v29, 128
    %v31 = vadd.s32 %v29, 256
    %v32 = vadd.s32 %v29, 384
    %33 = vset.pattern.permute.xlu0 0
    %34 = vperm.xlu0 %33, %v26
    %v35 = vpop.permute.xlu0 %34
    %36 = vset.pattern.permute.xlu0 0
    %37 = vperm.xlu0 %36, %v27
    %v38 = vpop.permute.xlu0 %37
    %vm39 = vcmp.eq.s32.totalorder %v29, %v35
    %vm40 = vcmp.eq.s32.totalorder %v30, %v35
    %vm41 = vcmp.eq.s32.totalorder %v31, %v35
    %vm42 = vcmp.eq.s32.totalorder %v32, %v35
    %vm43 = vcmp.eq.s32.totalorder %v29, %v38
    %vm44 = vcmp.eq.s32.totalorder %v30, %v38
    %vm45 = vcmp.eq.s32.totalorder %v31, %v38
    %vm46 = vcmp.eq.s32.totalorder %v32, %v38
    %47 = vset.pattern.permute.xlu0 1
    %48 = vperm.xlu0 %47, %v26
    %v49 = vpop.permute.xlu0 %48
    %50 = vset.pattern.permute.xlu0 1
    %51 = vperm.xlu0 %50, %v27
    %v52 = vpop.permute.xlu0 %51
    %vm53 = vcmp.eq.s32.totalorder %v29, %v49
    %vm54 = vcmp.eq.s32.totalorder %v30, %v49
    %vm55 = vcmp.eq.s32.totalorder %v31, %v49
    %vm56 = vcmp.eq.s32.totalorder %v32, %v49
    %vm57 = vcmp.eq.s32.totalorder %v29, %v52
    %vm58 = vcmp.eq.s32.totalorder %v30, %v52
    %vm59 = vcmp.eq.s32.totalorder %v31, %v52
    %vm60 = vcmp.eq.s32.totalorder %v32, %v52
    %vm61 = vmor %vm39, %vm53
    %vm62 = vmor %vm40, %vm54
    %vm63 = vmor %vm41, %vm55
    %vm64 = vmor %vm42, %vm56
    %vm65 = vmor %vm43, %vm57
    %vm66 = vmor %vm44, %vm58
    %vm67 = vmor %vm45, %vm59
    %vm68 = vmor %vm46, %vm60
    %69 = vset.pattern.permute.xlu0 2
    %70 = vperm.xlu0 %69, %v26
    %v71 = vpop.permute.xlu0 %70
    %72 = vset.pattern.permute.xlu0 2
    %73 = vperm.xlu0 %72, %v27
    %v74 = vpop.permute.xlu0 %73
    %vm75 = vcmp.eq.s32.totalorder %v29, %v71
    %vm76 = vcmp.eq.s32.totalorder %v30, %v71
    %vm77 = vcmp.eq.s32.totalorder %v31, %v71
    %vm78 = vcmp.eq.s32.totalorder %v32, %v71
    %vm79 = vcmp.eq.s32.totalorder %v29, %v74
    %vm80 = vcmp.eq.s32.totalorder %v30, %v74
    %vm81 = vcmp.eq.s32.totalorder %v31, %v74
    %vm82 = vcmp.eq.s32.totalorder %v32, %v74
    %vm83 = vmor %vm61, %vm75
    %vm84 = vmor %vm62, %vm76
    %vm85 = vmor %vm63, %vm77
    %vm86 = vmor %vm64, %vm78
    %vm87 = vmor %vm65, %vm79
    %vm88 = vmor %vm66, %vm80
    %vm89 = vmor %vm67, %vm81
    %vm90 = vmor %vm68, %vm82
    %v91 = vsel %vm83, 1, 0
    %v92 = vsel %vm84, 1, 0
    %v93 = vsel %vm85, 1, 0
    %v94 = vsel %vm86, 1, 0
    %v95 = vsel %vm87, 1, 0
    %v96 = vsel %vm88, 1, 0
    %v97 = vsel %vm89, 1, 0
    %v98 = vsel %vm90, 1, 0
    %v99 = vcvt.s32.f32 %v91
    %v100 = vcvt.s32.f32 %v92
    %v101 = vcvt.s32.f32 %v93
    %v102 = vcvt.s32.f32 %v94
    %v103 = vcvt.s32.f32 %v95
    %v104 = vcvt.s32.f32 %v96
    %v105 = vcvt.s32.f32 %v97
    %v106 = vcvt.s32.f32 %v98
    %v107 = vld [vmem:[#allocation2] sm:$0xff]
    %v108 = vld [vmem:[#allocation2 + $0x8] sm:$0xff]
    %v109 = vld [vmem:[#allocation2 + $0x10] sm:$0xff]
    %v110 = vld [vmem:[#allocation2 + $0x18] sm:$0xff]
    %v111 = vld [vmem:[#allocation2 + $0x20] sm:$0xff]
    %v112 = vld [vmem:[#allocation2 + $0x28] sm:$0xff]
    %v113 = vld [vmem:[#allocation2 + $0x30] sm:$0xff]
    %v114 = vld [vmem:[#allocation2 + $0x38] sm:$0xff]
    %v115 = vld [vmem:[#allocation2 + $0x40] sm:$0xff]
    %v116 = vld [vmem:[#allocation2 + $0x48] sm:$0xff]
    %v117 = vld [vmem:[#allocation2 + $0x50] sm:$0xff]
    %v118 = vld [vmem:[#allocation2 + $0x58] sm:$0xff]
    %v119 = vld [vmem:[#allocation2 + $0x60] sm:$0xff]
    %v120 = vld [vmem:[#allocation2 + $0x68] sm:$0xff]
    %v121 = vld [vmem:[#allocation2 + $0x70] sm:$0xff]
    %v122 = vld [vmem:[#allocation2 + $0x78] sm:$0xff]
    %v123 = vld [vmem:[#allocation2 + $0x80] sm:$0xff]
    %v124 = vld [vmem:[#allocation2 + $0x88] sm:$0xff]
    %v125 = vld [vmem:[#allocation2 + $0x90] sm:$0xff]
    %v126 = vld [vmem:[#allocation2 + $0x98] sm:$0xff]
    %v127 = vld [vmem:[#allocation2 + $0xa0] sm:$0xff]
    %v128 = vld [vmem:[#allocation2 + $0xa8] sm:$0xff]
    %v129 = vld [vmem:[#allocation2 + $0xb0] sm:$0xff]
    %v130 = vld [vmem:[#allocation2 + $0xb8] sm:$0xff]
    %v131 = vld [vmem:[#allocation2 + $0xc0] sm:$0xff]
    %v132 = vld [vmem:[#allocation2 + $0xc8] sm:$0xff]
    %v133 = vld [vmem:[#allocation2 + $0xd0] sm:$0xff]
    %v134 = vld [vmem:[#allocation2 + $0xd8] sm:$0xff]
    %v135 = vld [vmem:[#allocation2 + $0xe0] sm:$0xff]
    %v136 = vld [vmem:[#allocation2 + $0xe8] sm:$0xff]
    %v137 = vld [vmem:[#allocation2 + $0xf0] sm:$0xff]
    %v138 = vld [vmem:[#allocation2 + $0xf8] sm:$0xff]
    %v139 = vld [vmem:[#allocation2 + $0x100] sm:$0xff]
    %v140 = vld [vmem:[#allocation2 + $0x108] sm:$0xff]
    %v141 = vld [vmem:[#allocation2 + $0x110] sm:$0xff]
    %v142 = vld [vmem:[#allocation2 + $0x118] sm:$0xff]
    %v143 = vld [vmem:[#allocation2 + $0x120] sm:$0xff]
    %v144 = vld [vmem:[#allocation2 + $0x128] sm:$0xff]
    %v145 = vld [vmem:[#allocation2 + $0x130] sm:$0xff]
    %v146 = vld [vmem:[#allocation2 + $0x138] sm:$0xff]
    %v147 = vld [vmem:[#allocation2 + $0x140] sm:$0xff]
    %v148 = vld [vmem:[#allocation2 + $0x148] sm:$0xff]
    %v149 = vld [vmem:[#allocation2 + $0x150] sm:$0xff]
    %v150 = vld [vmem:[#allocation2 + $0x158] sm:$0xff]
    %v151 = vld [vmem:[#allocation2 + $0x160] sm:$0xff]
    %v152 = vld [vmem:[#allocation2 + $0x168] sm:$0xff]
    %v153 = vld [vmem:[#allocation2 + $0x170] sm:$0xff]
    %v154 = vld [vmem:[#allocation2 + $0x178] sm:$0xff]
    %v155 = vld [vmem:[#allocation2 + $0x180] sm:$0xff]
    %v156 = vld [vmem:[#allocation2 + $0x188] sm:$0xff]
    %v157 = vld [vmem:[#allocation2 + $0x190] sm:$0xff]
    %v158 = vld [vmem:[#allocation2 + $0x198] sm:$0xff]
    %v159 = vld [vmem:[#allocation2 + $0x1a0] sm:$0xff]
    %v160 = vld [vmem:[#allocation2 + $0x1a8] sm:$0xff]
    %v161 = vld [vmem:[#allocation2 + $0x1b0] sm:$0xff]
    %v162 = vld [vmem:[#allocation2 + $0x1b8] sm:$0xff]
    %v163 = vld [vmem:[#allocation2 + $0x1c0] sm:$0xff]
    %v164 = vld [vmem:[#allocation2 + $0x1c8] sm:$0xff]
    %v165 = vld [vmem:[#allocation2 + $0x1d0] sm:$0xff]
    %v166 = vld [vmem:[#allocation2 + $0x1d8] sm:$0xff]
    %v167 = vld [vmem:[#allocation2 + $0x1e0] sm:$0xff]
    %v168 = vld [vmem:[#allocation2 + $0x1e8] sm:$0xff]
    %v169 = vld [vmem:[#allocation2 + $0x1f0] sm:$0xff]
    %v170 = vld [vmem:[#allocation2 + $0x1f8] sm:$0xff]
    %v171 = vld [vmem:[#allocation2 + $0x200] sm:$0xff]
    %v172 = vld [vmem:[#allocation2 + $0x208] sm:$0xff]
    %v173 = vld [vmem:[#allocation2 + $0x210] sm:$0xff]
    %v174 = vld [vmem:[#allocation2 + $0x218] sm:$0xff]
    %v175 = vld [vmem:[#allocation2 + $0x220] sm:$0xff]
    %v176 = vld [vmem:[#allocation2 + $0x228] sm:$0xff]
    %v177 = vld [vmem:[#allocation2 + $0x230] sm:$0xff]
    %v178 = vld [vmem:[#allocation2 + $0x238] sm:$0xff]
    %v179 = vld [vmem:[#allocation2 + $0x240] sm:$0xff]
    %v180 = vld [vmem:[#allocation2 + $0x248] sm:$0xff]
    %v181 = vld [vmem:[#allocation2 + $0x250] sm:$0xff]
    %v182 = vld [vmem:[#allocation2 + $0x258] sm:$0xff]
    %v183 = vld [vmem:[#allocation2 + $0x260] sm:$0xff]
    %v184 = vld [vmem:[#allocation2 + $0x268] sm:$0xff]
    %v185 = vld [vmem:[#allocation2 + $0x270] sm:$0xff]
    %v186 = vld [vmem:[#allocation2 + $0x278] sm:$0xff]
    %v187 = vld [vmem:[#allocation2 + $0x280] sm:$0xff]
    %v188 = vld [vmem:[#allocation2 + $0x288] sm:$0xff]
    %v189 = vld [vmem:[#allocation2 + $0x290] sm:$0xff]
    %v190 = vld [vmem:[#allocation2 + $0x298] sm:$0xff]
    %v191 = vld [vmem:[#allocation2 + $0x2a0] sm:$0xff]
    %v192 = vld [vmem:[#allocation2 + $0x2a8] sm:$0xff]
    %v193 = vld [vmem:[#allocation2 + $0x2b0] sm:$0xff]
    %v194 = vld [vmem:[#allocation2 + $0x2b8] sm:$0xff]
    %v195 = vld [vmem:[#allocation2 + $0x2c0] sm:$0xff]
    %v196 = vld [vmem:[#allocation2 + $0x2c8] sm:$0xff]
    %v197 = vld [vmem:[#allocation2 + $0x2d0] sm:$0xff]
    %v198 = vld [vmem:[#allocation2 + $0x2d8] sm:$0xff]
    %v199 = vld [vmem:[#allocation2 + $0x2e0] sm:$0xff]
    %v200 = vld [vmem:[#allocation2 + $0x2e8] sm:$0xff]
    %v201 = vld [vmem:[#allocation2 + $0x2f0] sm:$0xff]
    %v202 = vld [vmem:[#allocation2 + $0x2f8] sm:$0xff]
    %v203 = vld [vmem:[#allocation2 + $0x300] sm:$0xff]
    %v204 = vld [vmem:[#allocation2 + $0x308] sm:$0xff]
    %v205 = vld [vmem:[#allocation2 + $0x310] sm:$0xff]
    %v206 = vld [vmem:[#allocation2 + $0x318] sm:$0xff]
    %v207 = vld [vmem:[#allocation2 + $0x320] sm:$0xff]
    %v208 = vld [vmem:[#allocation2 + $0x328] sm:$0xff]
    %v209 = vld [vmem:[#allocation2 + $0x330] sm:$0xff]
    %v210 = vld [vmem:[#allocation2 + $0x338] sm:$0xff]
    %v211 = vld [vmem:[#allocation2 + $0x340] sm:$0xff]
    %v212 = vld [vmem:[#allocation2 + $0x348] sm:$0xff]
    %v213 = vld [vmem:[#allocation2 + $0x350] sm:$0xff]
    %v214 = vld [vmem:[#allocation2 + $0x358] sm:$0xff]
    %v215 = vld [vmem:[#allocation2 + $0x360] sm:$0xff]
    %v216 = vld [vmem:[#allocation2 + $0x368] sm:$0xff]
    %v217 = vld [vmem:[#allocation2 + $0x370] sm:$0xff]
    %v218 = vld [vmem:[#allocation2 + $0x378] sm:$0xff]
    %v219 = vld [vmem:[#allocation2 + $0x380] sm:$0xff]
    %v220 = vld [vmem:[#allocation2 + $0x388] sm:$0xff]
    %v221 = vld [vmem:[#allocation2 + $0x390] sm:$0xff]
    %v222 = vld [vmem:[#allocation2 + $0x398] sm:$0xff]
    %v223 = vld [vmem:[#allocation2 + $0x3a0] sm:$0xff]
    %v224 = vld [vmem:[#allocation2 + $0x3a8] sm:$0xff]
    %v225 = vld [vmem:[#allocation2 + $0x3b0] sm:$0xff]
    %v226 = vld [vmem:[#allocation2 + $0x3b8] sm:$0xff]
    %v227 = vld [vmem:[#allocation2 + $0x3c0] sm:$0xff]
    %v228 = vld [vmem:[#allocation2 + $0x3c8] sm:$0xff]
    %v229 = vld [vmem:[#allocation2 + $0x3d0] sm:$0xff]
    %v230 = vld [vmem:[#allocation2 + $0x3d8] sm:$0xff]
    %v231 = vld [vmem:[#allocation2 + $0x3e0] sm:$0xff]
    %v232 = vld [vmem:[#allocation2 + $0x3e8] sm:$0xff]
    %v233 = vld [vmem:[#allocation2 + $0x3f0] sm:$0xff]
    %v234 = vld [vmem:[#allocation2 + $0x3f8] sm:$0xff]
    %235 = vmatprep.subr.mxu0 %v108
    %236 = vmatpush1.msra.mxu0 %v107
    %237 = vmatprep.subr.mxu0 %v110
    %238 = vmatpush1.msra.mxu0 %v109
    %239 = vmatprep.subr.mxu0 %v112
    %240 = vmatpush1.msra.mxu0 %v111
    %241 = vmatprep.subr.mxu0 %v114
    %242 = vmatpush1.msra.mxu0 %v113
    %243 = vmatprep.subr.mxu0 %v116
    %244 = vmatpush1.msra.mxu0 %v115
    %245 = vmatprep.subr.mxu0 %v118
    %246 = vmatpush1.msra.mxu0 %v117
    %247 = vmatprep.subr.mxu0 %v120
    %248 = vmatpush1.msra.mxu0 %v119
    %249 = vmatprep.subr.mxu0 %v122
    %250 = vmatpush1.msra.mxu0 %v121
    %251 = vmatprep.subr.mxu0 %v124
    %252 = vmatpush1.msra.mxu0 %v123
    %253 = vmatprep.subr.mxu0 %v126
    %254 = vmatpush1.msra.mxu0 %v125
    %255 = vmatprep.subr.mxu0 %v128
    %256 = vmatpush1.msra.mxu0 %v127
    %257 = vmatprep.subr.mxu0 %v130
    %258 = vmatpush1.msra.mxu0 %v129
    %259 = vmatprep.subr.mxu0 %v132
    %260 = vmatpush1.msra.mxu0 %v131
    %261 = vmatprep.subr.mxu0 %v134
    %262 = vmatpush1.msra.mxu0 %v133
    %263 = vmatprep.subr.mxu0 %v136
    %264 = vmatpush1.msra.mxu0 %v135
    %265 = vmatprep.subr.mxu0 %v138
    %266 = vmatpush1.msra.mxu0 %v137
    %267 = vmatprep.subr.mxu0 %v140
    %268 = vmatpush1.msra.mxu0 %v139
    %269 = vmatprep.subr.mxu0 %v142
    %270 = vmatpush1.msra.mxu0 %v141
    %271 = vmatprep.subr.mxu0 %v144
    %272 = vmatpush1.msra.mxu0 %v143
    %273 = vmatprep.subr.mxu0 %v146
    %274 = vmatpush1.msra.mxu0 %v145
    %275 = vmatprep.subr.mxu0 %v148
    %276 = vmatpush1.msra.mxu0 %v147
    %277 = vmatprep.subr.mxu0 %v150
    %278 = vmatpush1.msra.mxu0 %v149
    %279 = vmatprep.subr.mxu0 %v152
    %280 = vmatpush1.msra.mxu0 %v151
    %281 = vmatprep.subr.mxu0 %v154
    %282 = vmatpush1.msra.mxu0 %v153
    %283 = vmatprep.subr.mxu0 %v156
    %284 = vmatpush1.msra.mxu0 %v155
    %285 = vmatprep.subr.mxu0 %v158
    %286 = vmatpush1.msra.mxu0 %v157
    %287 = vmatprep.subr.mxu0 %v160
    %288 = vmatpush1.msra.mxu0 %v159
    %289 = vmatprep.subr.mxu0 %v162
    %290 = vmatpush1.msra.mxu0 %v161
    %291 = vmatprep.subr.mxu0 %v164
    %292 = vmatpush1.msra.mxu0 %v163
    %293 = vmatprep.subr.mxu0 %v166
    %294 = vmatpush1.msra.mxu0 %v165
    %295 = vmatprep.subr.mxu0 %v168
    %296 = vmatpush1.msra.mxu0 %v167
    %297 = vmatprep.subr.mxu0 %v170
    %298 = vmatpush1.msra.mxu0 %v169
    %299 = vmatprep.mubr.f32.mxu0 %v100
    %300 = vmatmul.mubr.f32.gmra.mrb[0].mxu0 %v99
    %v301 = vpop.f32.mrb[0].mxu0
    %v302 = vadd.f32 0.0, %v301
    %v303 = vpop.f32.mrb[0].mxu0
    %v304 = vadd.f32 0.0, %v303
    %305 = vmatprep.mubr.f32.mxu0 %v104
    %306 = vmatmul.mubr.f32.gmra.mrb[0].mxu0 %v103
    %v307 = vpop.f32.mrb[0].mxu0
    %v308 = vadd.f32 0.0, %v307
    %v309 = vpop.f32.mrb[0].mxu0
    %v310 = vadd.f32 0.0, %v309
    %311 = vdwg.mxu0
    %312 = vmatprep.subr.mxu0 %v172
    %313 = vmatpush1.msra.mxu0 %v171
    %314 = vmatprep.subr.mxu0 %v174
    %315 = vmatpush1.msra.mxu0 %v173
    %316 = vmatprep.subr.mxu0 %v176
    %317 = vmatpush1.msra.mxu0 %v175
    %318 = vmatprep.subr.mxu0 %v178
    %319 = vmatpush1.msra.mxu0 %v177
    %320 = vmatprep.subr.mxu0 %v180
    %321 = vmatpush1.msra.mxu0 %v179
    %322 = vmatprep.subr.mxu0 %v182
    %323 = vmatpush1.msra.mxu0 %v181
    %324 = vmatprep.subr.mxu0 %v184
    %325 = vmatpush1.msra.mxu0 %v183
    %326 = vmatprep.subr.mxu0 %v186
    %327 = vmatpush1.msra.mxu0 %v185
    %328 = vmatprep.subr.mxu0 %v188
    %329 = vmatpush1.msra.mxu0 %v187
    %330 = vmatprep.subr.mxu0 %v190
    %331 = vmatpush1.msra.mxu0 %v189
    %332 = vmatprep.subr.mxu0 %v192
    %333 = vmatpush1.msra.mxu0 %v191
    %334 = vmatprep.subr.mxu0 %v194
    %335 = vmatpush1.msra.mxu0 %v193
    %336 = vmatprep.subr.mxu0 %v196
    %337 = vmatpush1.msra.mxu0 %v195
    %338 = vmatprep.subr.mxu0 %v198
    %339 = vmatpush1.msra.mxu0 %v197
    %340 = vmatprep.subr.mxu0 %v200
    %341 = vmatpush1.msra.mxu0 %v199
    %342 = vmatprep.subr.mxu0 %v202
    %343 = vmatpush1.msra.mxu0 %v201
    %344 = vmatprep.subr.mxu0 %v204
    %345 = vmatpush1.msra.mxu0 %v203
    %346 = vmatprep.subr.mxu0 %v206
    %347 = vmatpush1.msra.mxu0 %v205
    %348 = vmatprep.subr.mxu0 %v208
    %349 = vmatpush1.msra.mxu0 %v207
    %350 = vmatprep.subr.mxu0 %v210
    %351 = vmatpush1.msra.mxu0 %v209
    %352 = vmatprep.subr.mxu0 %v212
    %353 = vmatpush1.msra.mxu0 %v211
    %354 = vmatprep.subr.mxu0 %v214
    %355 = vmatpush1.msra.mxu0 %v213
    %356 = vmatprep.subr.mxu0 %v216
    %357 = vmatpush1.msra.mxu0 %v215
    %358 = vmatprep.subr.mxu0 %v218
    %359 = vmatpush1.msra.mxu0 %v217
    %360 = vmatprep.subr.mxu0 %v220
    %361 = vmatpush1.msra.mxu0 %v219
    %362 = vmatprep.subr.mxu0 %v222
    %363 = vmatpush1.msra.mxu0 %v221
    %364 = vmatprep.subr.mxu0 %v224
    %365 = vmatpush1.msra.mxu0 %v223
    %366 = vmatprep.subr.mxu0 %v226
    %367 = vmatpush1.msra.mxu0 %v225
    %368 = vmatprep.subr.mxu0 %v228
    %369 = vmatpush1.msra.mxu0 %v227
    %370 = vmatprep.subr.mxu0 %v230
    %371 = vmatpush1.msra.mxu0 %v229
    %372 = vmatprep.subr.mxu0 %v232
    %373 = vmatpush1.msra.mxu0 %v231
    %374 = vmatprep.subr.mxu0 %v234
    %375 = vmatpush1.msra.mxu0 %v233
    %376 = vmatprep.mubr.f32.mxu0 %v102
    %377 = vmatmul.mubr.f32.gmra.mrb[0].mxu0 %v101
    %v378 = vpop.f32.mrb[0].mxu0
    %v379 = vadd.f32 %v302, %v378
    %v380 = vpop.f32.mrb[0].mxu0
    %v381 = vadd.f32 %v304, %v380
    %382 = vmatprep.mubr.f32.mxu0 %v106
    %383 = vmatmul.mubr.f32.gmra.mrb[0].mxu0 %v105
    %v384 = vpop.f32.mrb[0].mxu0
    %v385 = vadd.f32 %v308, %v384
    %v386 = vpop.f32.mrb[0].mxu0
    %v387 = vadd.f32 %v310, %v386
    %388 = vdwg.mxu0
    %v389 = vmul.u32 %v26, 32
    %v390 = vmul.u32 %v27, 32
    %391 = vset.pattern.permute.xlu0 3
    %392 = vperm.xlu0 %391, %v389
    %v393 = vpop.permute.xlu0 %392
    %394 = vset.pattern.permute.xlu0 3
    %395 = vperm.xlu0 %394, %v390
    %v396 = vpop.permute.xlu0 %395
    %vm397 = vcmp.ge.s32.totalorder %v29, %v393
    %vm398 = vcmp.ge.s32.totalorder %v30, %v393
    %vm399 = vcmp.ge.s32.totalorder %v29, %v396
    %vm400 = vcmp.ge.s32.totalorder %v30, %v396
    %v401 = vadd.s32 %v389, 32
    %v402 = vadd.s32 %v390, 32
    %403 = vset.pattern.permute.xlu0 3
    %404 = vperm.xlu0 %403, %v401
    %v405 = vpop.permute.xlu0 %404
    %406 = vset.pattern.permute.xlu0 3
    %407 = vperm.xlu0 %406, %v402
    %v408 = vpop.permute.xlu0 %407
    %vm409 = vcmp.lt.s32.totalorder %v29, %v405
    %vm410 = vcmp.lt.s32.totalorder %v30, %v405
    %vm411 = vcmp.lt.s32.totalorder %v29, %v408
    %vm412 = vcmp.lt.s32.totalorder %v30, %v408
    %vm413 = vmand %vm397, %vm409
    %vm414 = vmand %vm398, %vm410
    %vm415 = vmand %vm399, %vm411
    %vm416 = vmand %vm400, %vm412
    %v417 = vsel %vm413, %v379, 0.0
    %v418 = vsel %vm414, %v381, 0.0
    %v419 = vsel %vm415, %v385, 0.0
    %v420 = vsel %vm416, %v387, 0.0
    %423 = vrot.lane.b32.xlu0 %v417, 96
    %v424 = vpop.permute.xlu0 %423
    %425 = vrot.lane.b32.xlu0 %v419, 96
    %v426 = vpop.permute.xlu0 %425
    %v429 = vadd.f32 %v417, %v424
    %v430 = vadd.f32 %v419, %v426
    %431 = vrot.lane.b32.xlu0 %v417, 64
    %v432 = vpop.permute.xlu0 %431
    %433 = vrot.lane.b32.xlu0 %v419, 64
    %v434 = vpop.permute.xlu0 %433
    %v437 = vadd.f32 %v429, %v432
    %v438 = vadd.f32 %v430, %v434
    %439 = vrot.lane.b32.xlu0 %v417, 32
    %v440 = vpop.permute.xlu0 %439
    %441 = vrot.lane.b32.xlu0 %v419, 32
    %v442 = vpop.permute.xlu0 %441
    %v445 = vadd.f32 %v437, %v440
    %v446 = vadd.f32 %v438, %v442
    %v447 = vadd.f32 %v445, %v418
    %v448 = vadd.f32 %v446, %v420
    %451 = vrot.lane.b32.xlu0 %v418, 96
    %v452 = vpop.permute.xlu0 %451
    %453 = vrot.lane.b32.xlu0 %v420, 96
    %v454 = vpop.permute.xlu0 %453
    %v457 = vadd.f32 %v447, %v452
    %v458 = vadd.f32 %v448, %v454
    %459 = vrot.lane.b32.xlu0 %v418, 64
    %v460 = vpop.permute.xlu0 %459
    %461 = vrot.lane.b32.xlu0 %v420, 64
    %v462 = vpop.permute.xlu0 %461
    %v465 = vadd.f32 %v457, %v460
    %v466 = vadd.f32 %v458, %v462
    %467 = vrot.lane.b32.xlu0 %v418, 32
    %v468 = vpop.permute.xlu0 %467
    %469 = vrot.lane.b32.xlu0 %v420, 32
    %v470 = vpop.permute.xlu0 %469
    %v473 = vadd.f32 %v465, %v468
    %v474 = vadd.f32 %v466, %v470
    %vm475 = vcmask 261120
    %476 = vst.msk [vmem:[#allocation5] sm:$0xff] %vm475, %v473
    %477 = vst.msk [vmem:[#allocation5 + $0x8] sm:$0xff] %vm475, %v474
    // Predicated region
    $region14: #{tpu_custom_call.1} parent=1 // pred_check
      _
    $region15: #{tpu_custom_call.1} parent=1 // pred_check_branch
      %479 = sbr.rel (0) target = $region17
    $region16: #{tpu_custom_call.1} parent=1 // pred_region
      %s481 = ssub.s32 256, 256
      %482 = vsyncadd [#allocation4], %s481
      %s483 = sshll.u32 [#allocation5], 4
      %s484 = int_to_ptr.vmem [resolvable:$true] %s483
      %489 = dma.vmem_to_hbm [thread:$0]  %s484, 256, %s2, [#allocation4], 128, 128, 8
    $region17: #{tpu_custom_call.1} parent=1 // pred_fallthru
      _
    // Predicated region
    $region18: #{tpu_custom_call.1} parent=1 // pred_check
      _
    $region19: #{tpu_custom_call.1} parent=1 // pred_check_branch
      %491 = sbr.rel (0) target = $region21
    $region20: #{tpu_custom_call.1} parent=1 // pred_region
      %492 = dma.done [#allocation4], 256
    $region21: #{tpu_custom_call.1} parent=1 // pred_fallthru
      _
    %493 = vsyncpa [#allocation3], 1
    %494 = vsyncpa [#allocation4], 1

</llo_original>
